<compile_context>
chip_gen: v7x
topology: tpu7x:2x2x1
jax: 0.10.0
libtpu: 0.0.40
codegen_flags: <defaults>
</compile_context>

<pallas_src>
import math

import jax
import jax.numpy as jnp
from jax.experimental import pallas as pl
from jax.experimental.pallas import tpu as pltpu

ALPHA = 0.1
NEWTON_ITERS = 5
LANES = 128
SUBLANES = 8
BLOCK_ROWS = 2048          # (2048,128) f32 = 1 MiB block; in+out double-buffered = 4 MiB
LOG2 = math.log(2.0)
_F0 = (1.0 - ALPHA) * LOG2                 # f(0)
_FP0 = ALPHA + (1.0 - ALPHA) * 0.5         # f'(0)


def _leaky_softplus(x):
    # Forward function, written exactly as in the PyTorch reference (used for
    # the host-side sanity check).
    sp = jnp.log1p(jnp.exp(-jnp.abs(x))) + jnp.maximum(x, 0.0)
    return ALPHA * x + (1.0 - ALPHA) * sp


def _inv_leaky_softplus_kernel(y_ref, o_ref):
    y = y_ref[...]

    # Initial guess (both branches lie on the convex side, f(x0) >= y, so
    # Newton decreases monotonically to the root):
    #   y >= f(0):  x0 = y - (1-alpha)*log(2)   (exact as x -> +inf)
    #   y <  f(0):  x0 = (y - f(0)) / f'(0)     (tangent at 0; exact near 0,
    #                                            recovered in one step far left)
    x = jnp.where(y >= _F0, y - _F0, (y - _F0) * (1.0 / _FP0))

    for it in range(NEWTON_ITERS):
        e = jnp.exp(-jnp.abs(x))                        # shared exp (1 EUP push)
        sp = jnp.maximum(x, 0.0) + jnp.log1p(e)         # softplus(x)
        inv1pe = pl.reciprocal(1.0 + e, approx=True)    # 1/(1+e)
        sig = jnp.where(x >= 0.0, inv1pe, e * inv1pe)   # sigmoid(x)

        fx = ALPHA * x + (1.0 - ALPHA) * sp
        dfx = ALPHA + (1.0 - ALPHA) * sig               # >= ALPHA, no div hazard

        if it < NEWTON_ITERS - 1:
            x = x - (fx - y) * pl.reciprocal(dfx, approx=True)
        else:
            x = x - (fx - y) / dfx                      # exact divide on last step

    o_ref[...] = x.astype(o_ref.dtype)


def inverted_leaky_softplus(inp):
    """Pallas TPU implementation of InvertedLeakySoftplus.forward.

    Returns a float32 tensor of the same shape as `inp` (the PyTorch module
    always returns float32).
    """
    orig_shape = inp.shape
    flat = jnp.ravel(inp).astype(jnp.float32)
    n = flat.shape[0]

    # Lane-dense layout: (rows, 128) float32.
    rows = -(-n // LANES)
    if rows <= BLOCK_ROWS:
        # Small input: one block covering the whole (padded) array, grid of 1.
        block_rows = -(-rows // SUBLANES) * SUBLANES
    else:
        block_rows = BLOCK_ROWS
    rows_pad = -(-rows // block_rows) * block_rows
    n_pad = rows_pad * LANES
    if n_pad != n:
        flat = jnp.pad(flat, (0, n_pad - n))
    y2d = flat.reshape(rows_pad, LANES)

    grid = (rows_pad // block_rows,)
    out2d = pl.pallas_call(
        _inv_leaky_softplus_kernel,
        out_shape=jax.ShapeDtypeStruct((rows_pad, LANES), jnp.float32),
        grid_spec=pltpu.PrefetchScalarGridSpec(
            num_scalar_prefetch=0,
            grid=grid,
            in_specs=[pl.BlockSpec((block_rows, LANES), lambda i: (i, 0))],
            out_specs=pl.BlockSpec((block_rows, LANES), lambda i: (i, 0)),
        ),
        compiler_params=pltpu.CompilerParams(
            dimension_semantics=("parallel",)),
    )(y2d)

    return out2d.reshape(-1)[:n].reshape(orig_shape)


if __name__ == "__main__":
    key = jax.random.PRNGKey(0)
    # Small NCHW-style input; values in a range LeakySoftplus actually produces.
    x = jax.random.normal(key, (2, 4, 16, 16), dtype=jnp.float32) * 3.0

    out = inverted_leaky_softplus(x)
    out = jax.block_until_ready(out)

    # Sanity check: applying the forward LeakySoftplus to the kernel's output
    # should recover the input (inverse relationship).
    recon = _leaky_softplus(out)
    err = float(jnp.max(jnp.abs(recon - x)))
    assert out.shape == x.shape and out.dtype == jnp.float32
    assert err < 1e-3, f"inverse mismatch, max err {err}"

    print("KERNEL_OK")
</pallas_src>

<mosaic_0001>
module attributes {stable_mosaic.version = 11 : i64} {
  func.func @_inv_leaky_softplus_kernel(%arg0: i32, %arg1: memref<16x128xf32, #tpu.memory_space<vmem>>, %arg2: memref<16x128xf32, #tpu.memory_space<vmem>>) attributes {dimension_semantics = [#tpu.dimension_semantics<parallel>], iteration_bounds = array<i64: 1>, scalar_prefetch = 0 : i64, scratch_operands = 0 : i64, tpu.core_type = #tpu.core_type<tc>, window_params = [{transform_indices = @transform_0, window_bounds = array<i64: 16, 128>}, {transform_indices = @transform_1, window_bounds = array<i64: 16, 128>}]} {
    %c0 = arith.constant 0 : index
    %c0_0 = arith.constant 0 : index
    %0 = vector.load %arg1[%c0, %c0_0] : memref<16x128xf32, #tpu.memory_space<vmem>>, vector<16x128xf32>
    %cst = arith.constant 0.623832464 : f32
    %1 = vector.broadcast %cst : f32 to vector<16x128xf32>
    %2 = arith.cmpf oge, %0, %1 : vector<16x128xf32>
    %cst_1 = arith.constant 0.623832464 : f32
    %3 = vector.broadcast %cst_1 : f32 to vector<16x128xf32>
    %4 = arith.subf %0, %3 : vector<16x128xf32>
    %cst_2 = arith.constant 0.623832464 : f32
    %5 = vector.broadcast %cst_2 : f32 to vector<16x128xf32>
    %6 = arith.subf %0, %5 : vector<16x128xf32>
    %cst_3 = arith.constant 1.81818187 : f32
    %7 = vector.broadcast %cst_3 : f32 to vector<16x128xf32>
    %8 = arith.mulf %6, %7 : vector<16x128xf32>
    %9 = arith.select %2, %4, %8 : vector<16x128xi1>, vector<16x128xf32>
    %10 = math.absf %9 : vector<16x128xf32>
    %cst_4 = arith.constant 0.000000e+00 : f32
    %11 = vector.broadcast %cst_4 : f32 to vector<16x128xf32>
    %12 = arith.subf %11, %10 : vector<16x128xf32>
    %13 = math.exp %12 : vector<16x128xf32>
    %cst_5 = arith.constant 0.000000e+00 : f32
    %14 = vector.broadcast %cst_5 : f32 to vector<16x128xf32>
    %15 = arith.maximumf %9, %14 : vector<16x128xf32>
    %16 = math.log1p %13 : vector<16x128xf32>
    %17 = arith.addf %15, %16 : vector<16x128xf32>
    %cst_6 = arith.constant 1.000000e+00 : f32
    %18 = vector.broadcast %cst_6 : f32 to vector<16x128xf32>
    %19 = arith.addf %18, %13 : vector<16x128xf32>
    %20 = tpu.reciprocal %19 {approx = true} : vector<16x128xf32> -> vector<16x128xf32>
    %cst_7 = arith.constant 0.000000e+00 : f32
    %21 = vector.broadcast %cst_7 : f32 to vector<16x128xf32>
    %22 = arith.cmpf oge, %9, %21 : vector<16x128xf32>
    %23 = arith.mulf %13, %20 : vector<16x128xf32>
    %24 = arith.select %22, %20, %23 : vector<16x128xi1>, vector<16x128xf32>
    %cst_8 = arith.constant 1.000000e-01 : f32
    %25 = vector.broadcast %cst_8 : f32 to vector<16x128xf32>
    %26 = arith.mulf %25, %9 : vector<16x128xf32>
    %cst_9 = arith.constant 0.899999976 : f32
    %27 = vector.broadcast %cst_9 : f32 to vector<16x128xf32>
    %28 = arith.mulf %27, %17 : vector<16x128xf32>
    %29 = arith.addf %26, %28 : vector<16x128xf32>
    %cst_10 = arith.constant 0.899999976 : f32
    %30 = vector.broadcast %cst_10 : f32 to vector<16x128xf32>
    %31 = arith.mulf %30, %24 : vector<16x128xf32>
    %cst_11 = arith.constant 1.000000e-01 : f32
    %32 = vector.broadcast %cst_11 : f32 to vector<16x128xf32>
    %33 = arith.addf %32, %31 : vector<16x128xf32>
    %34 = arith.subf %29, %0 : vector<16x128xf32>
    %35 = tpu.reciprocal %33 {approx = true} : vector<16x128xf32> -> vector<16x128xf32>
    %36 = arith.mulf %34, %35 : vector<16x128xf32>
    %37 = arith.subf %9, %36 : vector<16x128xf32>
    %38 = math.absf %37 : vector<16x128xf32>
    %cst_12 = arith.constant 0.000000e+00 : f32
    %39 = vector.broadcast %cst_12 : f32 to vector<16x128xf32>
    %40 = arith.subf %39, %38 : vector<16x128xf32>
    %41 = math.exp %40 : vector<16x128xf32>
    %cst_13 = arith.constant 0.000000e+00 : f32
    %42 = vector.broadcast %cst_13 : f32 to vector<16x128xf32>
    %43 = arith.maximumf %37, %42 : vector<16x128xf32>
    %44 = math.log1p %41 : vector<16x128xf32>
    %45 = arith.addf %43, %44 : vector<16x128xf32>
    %cst_14 = arith.constant 1.000000e+00 : f32
    %46 = vector.broadcast %cst_14 : f32 to vector<16x128xf32>
    %47 = arith.addf %46, %41 : vector<16x128xf32>
    %48 = tpu.reciprocal %47 {approx = true} : vector<16x128xf32> -> vector<16x128xf32>
    %cst_15 = arith.constant 0.000000e+00 : f32
    %49 = vector.broadcast %cst_15 : f32 to vector<16x128xf32>
    %50 = arith.cmpf oge, %37, %49 : vector<16x128xf32>
    %51 = arith.mulf %41, %48 : vector<16x128xf32>
    %52 = arith.select %50, %48, %51 : vector<16x128xi1>, vector<16x128xf32>
    %cst_16 = arith.constant 1.000000e-01 : f32
    %53 = vector.broadcast %cst_16 : f32 to vector<16x128xf32>
    %54 = arith.mulf %53, %37 : vector<16x128xf32>
    %cst_17 = arith.constant 0.899999976 : f32
    %55 = vector.broadcast %cst_17 : f32 to vector<16x128xf32>
    %56 = arith.mulf %55, %45 : vector<16x128xf32>
    %57 = arith.addf %54, %56 : vector<16x128xf32>
    %cst_18 = arith.constant 0.899999976 : f32
    %58 = vector.broadcast %cst_18 : f32 to vector<16x128xf32>
    %59 = arith.mulf %58, %52 : vector<16x128xf32>
    %cst_19 = arith.constant 1.000000e-01 : f32
    %60 = vector.broadcast %cst_19 : f32 to vector<16x128xf32>
    %61 = arith.addf %60, %59 : vector<16x128xf32>
    %62 = arith.subf %57, %0 : vector<16x128xf32>
    %63 = tpu.reciprocal %61 {approx = true} : vector<16x128xf32> -> vector<16x128xf32>
    %64 = arith.mulf %62, %63 : vector<16x128xf32>
    %65 = arith.subf %37, %64 : vector<16x128xf32>
    %66 = math.absf %65 : vector<16x128xf32>
    %cst_20 = arith.constant 0.000000e+00 : f32
    %67 = vector.broadcast %cst_20 : f32 to vector<16x128xf32>
    %68 = arith.subf %67, %66 : vector<16x128xf32>
    %69 = math.exp %68 : vector<16x128xf32>
    %cst_21 = arith.constant 0.000000e+00 : f32
    %70 = vector.broadcast %cst_21 : f32 to vector<16x128xf32>
    %71 = arith.maximumf %65, %70 : vector<16x128xf32>
    %72 = math.log1p %69 : vector<16x128xf32>
    %73 = arith.addf %71, %72 : vector<16x128xf32>
    %cst_22 = arith.constant 1.000000e+00 : f32
    %74 = vector.broadcast %cst_22 : f32 to vector<16x128xf32>
    %75 = arith.addf %74, %69 : vector<16x128xf32>
    %76 = tpu.reciprocal %75 {approx = true} : vector<16x128xf32> -> vector<16x128xf32>
    %cst_23 = arith.constant 0.000000e+00 : f32
    %77 = vector.broadcast %cst_23 : f32 to vector<16x128xf32>
    %78 = arith.cmpf oge, %65, %77 : vector<16x128xf32>
    %79 = arith.mulf %69, %76 : vector<16x128xf32>
    %80 = arith.select %78, %76, %79 : vector<16x128xi1>, vector<16x128xf32>
    %cst_24 = arith.constant 1.000000e-01 : f32
    %81 = vector.broadcast %cst_24 : f32 to vector<16x128xf32>
    %82 = arith.mulf %81, %65 : vector<16x128xf32>
    %cst_25 = arith.constant 0.899999976 : f32
    %83 = vector.broadcast %cst_25 : f32 to vector<16x128xf32>
    %84 = arith.mulf %83, %73 : vector<16x128xf32>
    %85 = arith.addf %82, %84 : vector<16x128xf32>
    %cst_26 = arith.constant 0.899999976 : f32
    %86 = vector.broadcast %cst_26 : f32 to vector<16x128xf32>
    %87 = arith.mulf %86, %80 : vector<16x128xf32>
    %cst_27 = arith.constant 1.000000e-01 : f32
    %88 = vector.broadcast %cst_27 : f32 to vector<16x128xf32>
    %89 = arith.addf %88, %87 : vector<16x128xf32>
    %90 = arith.subf %85, %0 : vector<16x128xf32>
    %91 = tpu.reciprocal %89 {approx = true} : vector<16x128xf32> -> vector<16x128xf32>
    %92 = arith.mulf %90, %91 : vector<16x128xf32>
    %93 = arith.subf %65, %92 : vector<16x128xf32>
    %94 = math.absf %93 : vector<16x128xf32>
    %cst_28 = arith.constant 0.000000e+00 : f32
    %95 = vector.broadcast %cst_28 : f32 to vector<16x128xf32>
    %96 = arith.subf %95, %94 : vector<16x128xf32>
    %97 = math.exp %96 : vector<16x128xf32>
    %cst_29 = arith.constant 0.000000e+00 : f32
    %98 = vector.broadcast %cst_29 : f32 to vector<16x128xf32>
    %99 = arith.maximumf %93, %98 : vector<16x128xf32>
    %100 = math.log1p %97 : vector<16x128xf32>
    %101 = arith.addf %99, %100 : vector<16x128xf32>
    %cst_30 = arith.constant 1.000000e+00 : f32
    %102 = vector.broadcast %cst_30 : f32 to vector<16x128xf32>
    %103 = arith.addf %102, %97 : vector<16x128xf32>
    %104 = tpu.reciprocal %103 {approx = true} : vector<16x128xf32> -> vector<16x128xf32>
    %cst_31 = arith.constant 0.000000e+00 : f32
    %105 = vector.broadcast %cst_31 : f32 to vector<16x128xf32>
    %106 = arith.cmpf oge, %93, %105 : vector<16x128xf32>
    %107 = arith.mulf %97, %104 : vector<16x128xf32>
    %108 = arith.select %106, %104, %107 : vector<16x128xi1>, vector<16x128xf32>
    %cst_32 = arith.constant 1.000000e-01 : f32
    %109 = vector.broadcast %cst_32 : f32 to vector<16x128xf32>
    %110 = arith.mulf %109, %93 : vector<16x128xf32>
    %cst_33 = arith.constant 0.899999976 : f32
    %111 = vector.broadcast %cst_33 : f32 to vector<16x128xf32>
    %112 = arith.mulf %111, %101 : vector<16x128xf32>
    %113 = arith.addf %110, %112 : vector<16x128xf32>
    %cst_34 = arith.constant 0.899999976 : f32
    %114 = vector.broadcast %cst_34 : f32 to vector<16x128xf32>
    %115 = arith.mulf %114, %108 : vector<16x128xf32>
    %cst_35 = arith.constant 1.000000e-01 : f32
    %116 = vector.broadcast %cst_35 : f32 to vector<16x128xf32>
    %117 = arith.addf %116, %115 : vector<16x128xf32>
    %118 = arith.subf %113, %0 : vector<16x128xf32>
    %119 = tpu.reciprocal %117 {approx = true} : vector<16x128xf32> -> vector<16x128xf32>
    %120 = arith.mulf %118, %119 : vector<16x128xf32>
    %121 = arith.subf %93, %120 : vector<16x128xf32>
    %122 = math.absf %121 : vector<16x128xf32>
    %cst_36 = arith.constant 0.000000e+00 : f32
    %123 = vector.broadcast %cst_36 : f32 to vector<16x128xf32>
    %124 = arith.subf %123, %122 : vector<16x128xf32>
    %125 = math.exp %124 : vector<16x128xf32>
    %cst_37 = arith.constant 0.000000e+00 : f32
    %126 = vector.broadcast %cst_37 : f32 to vector<16x128xf32>
    %127 = arith.maximumf %121, %126 : vector<16x128xf32>
    %128 = math.log1p %125 : vector<16x128xf32>
    %129 = arith.addf %127, %128 : vector<16x128xf32>
    %cst_38 = arith.constant 1.000000e+00 : f32
    %130 = vector.broadcast %cst_38 : f32 to vector<16x128xf32>
    %131 = arith.addf %130, %125 : vector<16x128xf32>
    %132 = tpu.reciprocal %131 {approx = true} : vector<16x128xf32> -> vector<16x128xf32>
    %cst_39 = arith.constant 0.000000e+00 : f32
    %133 = vector.broadcast %cst_39 : f32 to vector<16x128xf32>
    %134 = arith.cmpf oge, %121, %133 : vector<16x128xf32>
    %135 = arith.mulf %125, %132 : vector<16x128xf32>
    %136 = arith.select %134, %132, %135 : vector<16x128xi1>, vector<16x128xf32>
    %cst_40 = arith.constant 1.000000e-01 : f32
    %137 = vector.broadcast %cst_40 : f32 to vector<16x128xf32>
    %138 = arith.mulf %137, %121 : vector<16x128xf32>
    %cst_41 = arith.constant 0.899999976 : f32
    %139 = vector.broadcast %cst_41 : f32 to vector<16x128xf32>
    %140 = arith.mulf %139, %129 : vector<16x128xf32>
    %141 = arith.addf %138, %140 : vector<16x128xf32>
    %cst_42 = arith.constant 0.899999976 : f32
    %142 = vector.broadcast %cst_42 : f32 to vector<16x128xf32>
    %143 = arith.mulf %142, %136 : vector<16x128xf32>
    %cst_43 = arith.constant 1.000000e-01 : f32
    %144 = vector.broadcast %cst_43 : f32 to vector<16x128xf32>
    %145 = arith.addf %144, %143 : vector<16x128xf32>
    %146 = arith.subf %141, %0 : vector<16x128xf32>
    %147 = arith.divf %146, %145 : vector<16x128xf32>
    %148 = arith.subf %121, %147 : vector<16x128xf32>
    %c0_44 = arith.constant 0 : index
    %c0_45 = arith.constant 0 : index
    %149 = vector.load %arg2[%c0_44, %c0_45] : memref<16x128xf32, #tpu.memory_space<vmem>>, vector<16x128xf32>
    tpu.vector_store %arg2[%c0_44, %c0_45], %148 {strides = array<i32>} : memref<16x128xf32, #tpu.memory_space<vmem>>, vector<16x128xf32>,
    return
  }
  func.func @transform_0(%arg0: i32) -> (i32, i32) {
    %c0_i32 = arith.constant 0 : i32
    %c0_i32_0 = arith.constant 0 : i32
    return %arg0, %c0_i32 : i32, i32
  }
  func.func @transform_1(%arg0: i32) -> (i32, i32) {
    %c0_i32 = arith.constant 0 : i32
    %c0_i32_0 = arith.constant 0 : i32
    return %arg0, %c0_i32 : i32, i32
  }
}

</mosaic_0001>

<llo_original>
// kernel: tpu_custom_call.1
$region0: #{tpu_custom_call.1}
  #allocation0 [shape = 'u32[]', space=smem, size = 0x4, offset = 0x4, fixed_abs, tag = 'smem constant byte address 0x4 - core index']
  #allocation1 [shape = 'u32[144,128]{1,0:T(1,128)}', space=vmem, size = 0x12000, scoped, tag = 'internal scratch']
  %s0 = inlined_call_operand.hbm [shape: f32[16,128], index: 0, kind: input, shape index: {}]
  %s1 = inlined_call_operand.hbm [shape: f32[16,128], index: 1, kind: output, shape index: {}]
  %s2 = sld [smem:[#allocation0]]
  $region18: #{tpu_custom_call.1} parent=0
    _
  %s4 = ssub.s32 1, %s2
  %s5 = scalar_select 0, %s4, %s2
  $region1: #{tpu_custom_call.1} parent=0
    #allocation2 [shape = 'u8[8192]{0}', space=vmem, size = 0x2000, scoped, tag = 'input window, operand 0, single buffered']
    #allocation3 [shape = 's32[1]{0}', space=sflag, size = 0x4, scoped, tag = 'scoped memory for tpu_custom_call.1']
    #allocation4 [shape = 's32[1]{0}', space=sflag, size = 0x4, scoped, tag = 'scoped memory for tpu_custom_call.1']
    #allocation5 [shape = 'u8[8192]{0}', space=vmem, size = 0x2000, scoped, tag = 'output window, operand 0, single buffered']
    %6 = vsyncpa [#allocation3], 0
    %7 = vsyncpa [#allocation4], 0
    // Predicated region
    $region2: #{tpu_custom_call.1} parent=1 // pred_check
      _
    $region3: #{tpu_custom_call.1} parent=1 // pred_check_branch
      %9 = sbr.rel (0) target = $region5
    $region4: #{tpu_custom_call.1} parent=1 // pred_region
      %s11 = ssub.s32 256, 256
      %12 = vsyncadd [#allocation3], %s11
      %s13 = sshll.u32 [#allocation2], 4
      %s14 = int_to_ptr.vmem [resolvable:$true] %s13
      %19 = dma.hbm_to_vmem [thread:$0]  %s0, 256, %s14, [#allocation3], 128, 128, 8
    $region5: #{tpu_custom_call.1} parent=1 // pred_fallthru
      _
    // Predicated region
    $region6: #{tpu_custom_call.1} parent=1 // pred_check
      _
    $region7: #{tpu_custom_call.1} parent=1 // pred_check_branch
      %21 = sbr.rel (0) target = $region9
    $region8: #{tpu_custom_call.1} parent=1 // pred_region
      %22 = dma.done [#allocation3], 256
    $region9: #{tpu_custom_call.1} parent=1 // pred_fallthru
      _
    %v23 = vld [vmem:[#allocation2] sm:$0xff]
    %v24 = vld [vmem:[#allocation2 + $0x8] sm:$0xff]
    %vm25 = vcmp.ge.f32.partialorder %v23, 0.62383246
    %vm26 = vcmp.ge.f32.partialorder %v24, 0.62383246
    %v27 = vsub.f32 %v23, 0.62383246
    %v28 = vsub.f32 %v24, 0.62383246
    %v29 = vmul.f32 %v27, 1.8181819
    %v30 = vmul.f32 %v28, 1.8181819
    %v31 = vsel %vm25, %v27, %v29
    %v32 = vsel %vm26, %v28, %v30
    %v33 = vand.u32 2147483647, %v31
    %v34 = vand.u32 2147483647, %v32
    %v35 = vsub.f32 0.0, %v33
    %v36 = vsub.f32 0.0, %v34
    %v37 = vmul.f32 %v35, 1.442695
    %v38 = vpow.pop %v37
    %v39 = vmul.f32 %v36, 1.442695
    %v40 = vpow.pop %v39
    %v41 = vmax.f32 %v31, 0.0
    %v42 = vmax.f32 %v32, 0.0
    %v43 = vadd.f32 %v38, 1.0
    %v44 = vlog2.pop %v43
    %v45 = vmul.f32 %v44, 0.6931472
    %v46 = vmul.f32 -0.5, %v38
    %v47 = vadd.f32 %v46, 1.0
    %v48 = vmul.f32 %v47, %v38
    %v49 = vand.u32 2147483647, %v38
    %vm50 = vcmp.lt.f32.partialorder %v49, 0.0004427343
    %v51 = vsel %vm50, %v48, %v45
    %v52 = vadd.f32 %v40, 1.0
    %v53 = vlog2.pop %v52
    %v54 = vmul.f32 %v53, 0.6931472
    %v55 = vmul.f32 -0.5, %v40
    %v56 = vadd.f32 %v55, 1.0
    %v57 = vmul.f32 %v56, %v40
    %v58 = vand.u32 2147483647, %v40
    %vm59 = vcmp.lt.f32.partialorder %v58, 0.0004427343
    %v60 = vsel %vm59, %v57, %v54
    %v61 = vadd.f32 %v41, %v51
    %v62 = vadd.f32 %v42, %v60
    %v63 = vadd.f32 %v38, 1.0
    %v64 = vadd.f32 %v40, 1.0
    %v65 = vrcp.pop %v63
    %v66 = vrcp.pop %v64
    %vm67 = vcmp.ge.f32.partialorder %v31, 0.0
    %vm68 = vcmp.ge.f32.partialorder %v32, 0.0
    %v69 = vmul.f32 %v38, %v65
    %v70 = vmul.f32 %v40, %v66
    %v71 = vsel %vm67, %v65, %v69
    %v72 = vsel %vm68, %v66, %v70
    %v73 = vmul.f32 %v31, 0.1
    %v74 = vmul.f32 %v32, 0.1
    %v75 = vmul.f32 %v61, 0.9
    %v76 = vmul.f32 %v62, 0.9
    %v77 = vadd.f32 %v73, %v75
    %v78 = vadd.f32 %v74, %v76
    %v79 = vmul.f32 %v71, 0.9
    %v80 = vmul.f32 %v72, 0.9
    %v81 = vadd.f32 %v79, 0.1
    %v82 = vadd.f32 %v80, 0.1
    %v83 = vsub.f32 %v77, %v23
    %v84 = vsub.f32 %v78, %v24
    %v85 = vrcp.pop %v81
    %v86 = vrcp.pop %v82
    %v87 = vmul.f32 %v83, %v85
    %v88 = vmul.f32 %v84, %v86
    %v89 = vsub.f32 %v31, %v87
    %v90 = vsub.f32 %v32, %v88
    %v91 = vand.u32 2147483647, %v89
    %v92 = vand.u32 2147483647, %v90
    %v93 = vsub.f32 0.0, %v91
    %v94 = vsub.f32 0.0, %v92
    %v95 = vmul.f32 %v93, 1.442695
    %v96 = vpow.pop %v95
    %v97 = vmul.f32 %v94, 1.442695
    %v98 = vpow.pop %v97
    %v99 = vmax.f32 %v89, 0.0
    %v100 = vmax.f32 %v90, 0.0
    %v101 = vadd.f32 %v96, 1.0
    %v102 = vlog2.pop %v101
    %v103 = vmul.f32 %v102, 0.6931472
    %v104 = vmul.f32 -0.5, %v96
    %v105 = vadd.f32 %v104, 1.0
    %v106 = vmul.f32 %v105, %v96
    %v107 = vand.u32 2147483647, %v96
    %vm108 = vcmp.lt.f32.partialorder %v107, 0.0004427343
    %v109 = vsel %vm108, %v106, %v103
    %v110 = vadd.f32 %v98, 1.0
    %v111 = vlog2.pop %v110
    %v112 = vmul.f32 %v111, 0.6931472
    %v113 = vmul.f32 -0.5, %v98
    %v114 = vadd.f32 %v113, 1.0
    %v115 = vmul.f32 %v114, %v98
    %v116 = vand.u32 2147483647, %v98
    %vm117 = vcmp.lt.f32.partialorder %v116, 0.0004427343
    %v118 = vsel %vm117, %v115, %v112
    %v119 = vadd.f32 %v99, %v109
    %v120 = vadd.f32 %v100, %v118
    %v121 = vadd.f32 %v96, 1.0
    %v122 = vadd.f32 %v98, 1.0
    %v123 = vrcp.pop %v121
    %v124 = vrcp.pop %v122
    %vm125 = vcmp.ge.f32.partialorder %v89, 0.0
    %vm126 = vcmp.ge.f32.partialorder %v90, 0.0
    %v127 = vmul.f32 %v96, %v123
    %v128 = vmul.f32 %v98, %v124
    %v129 = vsel %vm125, %v123, %v127
    %v130 = vsel %vm126, %v124, %v128
    %v131 = vmul.f32 %v89, 0.1
    %v132 = vmul.f32 %v90, 0.1
    %v133 = vmul.f32 %v119, 0.9
    %v134 = vmul.f32 %v120, 0.9
    %v135 = vadd.f32 %v131, %v133
    %v136 = vadd.f32 %v132, %v134
    %v137 = vmul.f32 %v129, 0.9
    %v138 = vmul.f32 %v130, 0.9
    %v139 = vadd.f32 %v137, 0.1
    %v140 = vadd.f32 %v138, 0.1
    %v141 = vsub.f32 %v135, %v23
    %v142 = vsub.f32 %v136, %v24
    %v143 = vrcp.pop %v139
    %v144 = vrcp.pop %v140
    %v145 = vmul.f32 %v141, %v143
    %v146 = vmul.f32 %v142, %v144
    %v147 = vsub.f32 %v89, %v145
    %v148 = vsub.f32 %v90, %v146
    %v149 = vand.u32 2147483647, %v147
    %v150 = vand.u32 2147483647, %v148
    %v151 = vsub.f32 0.0, %v149
    %v152 = vsub.f32 0.0, %v150
    %v153 = vmul.f32 %v151, 1.442695
    %v154 = vpow.pop %v153
    %v155 = vmul.f32 %v152, 1.442695
    %v156 = vpow.pop %v155
    %v157 = vmax.f32 %v147, 0.0
    %v158 = vmax.f32 %v148, 0.0
    %v159 = vadd.f32 %v154, 1.0
    %v160 = vlog2.pop %v159
    %v161 = vmul.f32 %v160, 0.6931472
    %v162 = vmul.f32 -0.5, %v154
    %v163 = vadd.f32 %v162, 1.0
    %v164 = vmul.f32 %v163, %v154
    %v165 = vand.u32 2147483647, %v154
    %vm166 = vcmp.lt.f32.partialorder %v165, 0.0004427343
    %v167 = vsel %vm166, %v164, %v161
    %v168 = vadd.f32 %v156, 1.0
    %v169 = vlog2.pop %v168
    %v170 = vmul.f32 %v169, 0.6931472
    %v171 = vmul.f32 -0.5, %v156
    %v172 = vadd.f32 %v171, 1.0
    %v173 = vmul.f32 %v172, %v156
    %v174 = vand.u32 2147483647, %v156
    %vm175 = vcmp.lt.f32.partialorder %v174, 0.0004427343
    %v176 = vsel %vm175, %v173, %v170
    %v177 = vadd.f32 %v157, %v167
    %v178 = vadd.f32 %v158, %v176
    %v179 = vadd.f32 %v154, 1.0
    %v180 = vadd.f32 %v156, 1.0
    %v181 = vrcp.pop %v179
    %v182 = vrcp.pop %v180
    %vm183 = vcmp.ge.f32.partialorder %v147, 0.0
    %vm184 = vcmp.ge.f32.partialorder %v148, 0.0
    %v185 = vmul.f32 %v154, %v181
    %v186 = vmul.f32 %v156, %v182
    %v187 = vsel %vm183, %v181, %v185
    %v188 = vsel %vm184, %v182, %v186
    %v189 = vmul.f32 %v147, 0.1
    %v190 = vmul.f32 %v148, 0.1
    %v191 = vmul.f32 %v177, 0.9
    %v192 = vmul.f32 %v178, 0.9
    %v193 = vadd.f32 %v189, %v191
    %v194 = vadd.f32 %v190, %v192
    %v195 = vmul.f32 %v187, 0.9
    %v196 = vmul.f32 %v188, 0.9
    %v197 = vadd.f32 %v195, 0.1
    %v198 = vadd.f32 %v196, 0.1
    %v199 = vsub.f32 %v193, %v23
    %v200 = vsub.f32 %v194, %v24
    %v201 = vrcp.pop %v197
    %v202 = vrcp.pop %v198
    %v203 = vmul.f32 %v199, %v201
    %v204 = vmul.f32 %v200, %v202
    %v205 = vsub.f32 %v147, %v203
    %v206 = vsub.f32 %v148, %v204
    %v207 = vand.u32 2147483647, %v205
    %v208 = vand.u32 2147483647, %v206
    %v209 = vsub.f32 0.0, %v207
    %v210 = vsub.f32 0.0, %v208
    %v211 = vmul.f32 %v209, 1.442695
    %v212 = vpow.pop %v211
    %v213 = vmul.f32 %v210, 1.442695
    %v214 = vpow.pop %v213
    %v215 = vmax.f32 %v205, 0.0
    %v216 = vmax.f32 %v206, 0.0
    %v217 = vadd.f32 %v212, 1.0
    %v218 = vlog2.pop %v217
    %v219 = vmul.f32 %v218, 0.6931472
    %v220 = vmul.f32 -0.5, %v212
    %v221 = vadd.f32 %v220, 1.0
    %v222 = vmul.f32 %v221, %v212
    %v223 = vand.u32 2147483647, %v212
    %vm224 = vcmp.lt.f32.partialorder %v223, 0.0004427343
    %v225 = vsel %vm224, %v222, %v219
    %v226 = vadd.f32 %v214, 1.0
    %v227 = vlog2.pop %v226
    %v228 = vmul.f32 %v227, 0.6931472
    %v229 = vmul.f32 -0.5, %v214
    %v230 = vadd.f32 %v229, 1.0
    %v231 = vmul.f32 %v230, %v214
    %v232 = vand.u32 2147483647, %v214
    %vm233 = vcmp.lt.f32.partialorder %v232, 0.0004427343
    %v234 = vsel %vm233, %v231, %v228
    %v235 = vadd.f32 %v215, %v225
    %v236 = vadd.f32 %v216, %v234
    %v237 = vadd.f32 %v212, 1.0
    %v238 = vadd.f32 %v214, 1.0
    %v239 = vrcp.pop %v237
    %v240 = vrcp.pop %v238
    %vm241 = vcmp.ge.f32.partialorder %v205, 0.0
    %vm242 = vcmp.ge.f32.partialorder %v206, 0.0
    %v243 = vmul.f32 %v212, %v239
    %v244 = vmul.f32 %v214, %v240
    %v245 = vsel %vm241, %v239, %v243
    %v246 = vsel %vm242, %v240, %v244
    %v247 = vmul.f32 %v205, 0.1
    %v248 = vmul.f32 %v206, 0.1
    %v249 = vmul.f32 %v235, 0.9
    %v250 = vmul.f32 %v236, 0.9
    %v251 = vadd.f32 %v247, %v249
    %v252 = vadd.f32 %v248, %v250
    %v253 = vmul.f32 %v245, 0.9
    %v254 = vmul.f32 %v246, 0.9
    %v255 = vadd.f32 %v253, 0.1
    %v256 = vadd.f32 %v254, 0.1
    %v257 = vsub.f32 %v251, %v23
    %v258 = vsub.f32 %v252, %v24
    %v259 = vrcp.pop %v255
    %v260 = vrcp.pop %v256
    %v261 = vmul.f32 %v257, %v259
    %v262 = vmul.f32 %v258, %v260
    %v263 = vsub.f32 %v205, %v261
    %v264 = vsub.f32 %v206, %v262
    %v265 = vand.u32 2147483647, %v263
    %v266 = vand.u32 2147483647, %v264
    %v267 = vsub.f32 0.0, %v265
    %v268 = vsub.f32 0.0, %v266
    %v269 = vmul.f32 %v267, 1.442695
    %v270 = vpow.pop %v269
    %v271 = vmul.f32 %v268, 1.442695
    %v272 = vpow.pop %v271
    %v273 = vmax.f32 %v263, 0.0
    %v274 = vmax.f32 %v264, 0.0
    %v275 = vadd.f32 %v270, 1.0
    %v276 = vlog2.pop %v275
    %v277 = vmul.f32 %v276, 0.6931472
    %v278 = vmul.f32 -0.5, %v270
    %v279 = vadd.f32 %v278, 1.0
    %v280 = vmul.f32 %v279, %v270
    %v281 = vand.u32 2147483647, %v270
    %vm282 = vcmp.lt.f32.partialorder %v281, 0.0004427343
    %v283 = vsel %vm282, %v280, %v277
    %v284 = vadd.f32 %v272, 1.0
    %v285 = vlog2.pop %v284
    %v286 = vmul.f32 %v285, 0.6931472
    %v287 = vmul.f32 -0.5, %v272
    %v288 = vadd.f32 %v287, 1.0
    %v289 = vmul.f32 %v288, %v272
    %v290 = vand.u32 2147483647, %v272
    %vm291 = vcmp.lt.f32.partialorder %v290, 0.0004427343
    %v292 = vsel %vm291, %v289, %v286
    %v293 = vadd.f32 %v273, %v283
    %v294 = vadd.f32 %v274, %v292
    %v295 = vadd.f32 %v270, 1.0
    %v296 = vadd.f32 %v272, 1.0
    %v297 = vrcp.pop %v295
    %v298 = vrcp.pop %v296
    %vm299 = vcmp.ge.f32.partialorder %v263, 0.0
    %vm300 = vcmp.ge.f32.partialorder %v264, 0.0
    %v301 = vmul.f32 %v270, %v297
    %v302 = vmul.f32 %v272, %v298
    %v303 = vsel %vm299, %v297, %v301
    %v304 = vsel %vm300, %v298, %v302
    %v305 = vmul.f32 %v263, 0.1
    %v306 = vmul.f32 %v264, 0.1
    %v307 = vmul.f32 %v293, 0.9
    %v308 = vmul.f32 %v294, 0.9
    %v309 = vadd.f32 %v305, %v307
    %v310 = vadd.f32 %v306, %v308
    %v311 = vmul.f32 %v303, 0.9
    %v312 = vmul.f32 %v304, 0.9
    %v313 = vadd.f32 %v311, 0.1
    %v314 = vadd.f32 %v312, 0.1
    %v315 = vsub.f32 %v309, %v23
    %v316 = vsub.f32 %v310, %v24
    %v317 = vrcp.pop %v313
    %v318 = vmul.f32 %v315, %v317
    %v319 = vrcp.pop %v314
    %v320 = vmul.f32 %v316, %v319
    %v321 = vsub.f32 %v263, %v318
    %v322 = vsub.f32 %v264, %v320
    %323 = vst [vmem:[#allocation5] sm:$0xff] %v321
    %324 = vst [vmem:[#allocation5 + $0x8] sm:$0xff] %v322
    // Predicated region
    $region10: #{tpu_custom_call.1} parent=1 // pred_check
      _
    $region11: #{tpu_custom_call.1} parent=1 // pred_check_branch
      %326 = sbr.rel (0) target = $region13
    $region12: #{tpu_custom_call.1} parent=1 // pred_region
      %s328 = ssub.s32 256, 256
      %329 = vsyncadd [#allocation4], %s328
      %s330 = sshll.u32 [#allocation5], 4
      %s331 = int_to_ptr.vmem [resolvable:$true] %s330
      %336 = dma.vmem_to_hbm [thread:$0]  %s331, 256, %s1, [#allocation4], 128, 128, 8
    $region13: #{tpu_custom_call.1} parent=1 // pred_fallthru
      _
    // Predicated region
    $region14: #{tpu_custom_call.1} parent=1 // pred_check
      _
    $region15: #{tpu_custom_call.1} parent=1 // pred_check_branch
      %338 = sbr.rel (0) target = $region17
    $region16: #{tpu_custom_call.1} parent=1 // pred_region
      %339 = dma.done [#allocation4], 256
    $region17: #{tpu_custom_call.1} parent=1 // pred_fallthru
      _
    %340 = vsyncpa [#allocation3], 1
    %341 = vsyncpa [#allocation4], 1

</llo_original>
